<compile_context>
chip_gen: v5e
topology: v5e:2x2
jax: 0.10.0
libtpu: 0.0.40
codegen_flags: <defaults>
</compile_context>

<pallas_src>
import functools

import jax
import jax.numpy as jnp
from jax.experimental import pallas as pl
from jax.experimental.pallas import tpu as pltpu

_LANE = 128


def _cdiv(a, b):
    return -(-a // b)


def _round_up(a, b):
    return _cdiv(a, b) * b


def _sublane_min(dtype):
    """Minimum sublane tile for a dtype (sub-32-bit dtypes pack along sublanes)."""
    return {4: 8, 2: 16, 1: 32}.get(jnp.dtype(dtype).itemsize, 8)


@functools.lru_cache(maxsize=1)
def _vmem_capacity_bytes():
    """Generation-aware VMEM capacity; conservative fallback = v7x's 64 MiB/TC."""
    try:
        info = pltpu.get_tpu_info()
        cap = getattr(info, "vmem_capacity_bytes", None)
        if cap:
            return int(cap)
    except Exception:  # pragma: no cover - info query is best-effort
        pass
    return 64 * 1024 * 1024


# ----------------------------------------------------------------------------
# Pallas kernel: tiled identity copy (the only data motion BaseTask itself
# could ever be responsible for).  Purely memory bound; one vld + one vst per
# tile, fully hidden under the BlockSpec DMA pipeline.
# ----------------------------------------------------------------------------
def _identity_copy_kernel(x_ref, o_ref):
    o_ref[...] = x_ref[...]


def _pallas_identity_2d(x2d):
    """Tiled identity copy of a lane-dense slab: cols a large multiple of 128."""
    rows, cols = x2d.shape
    itemsize = jnp.dtype(x2d.dtype).itemsize
    sub = _sublane_min(x2d.dtype)
    row_bytes = cols * itemsize

    # Generation-aware block target: (in + out) x double buffering = 4 live
    # blocks kept at <= half of VMEM.
    #   v5e/v6e (128 MiB VMEM) -> 16 MiB blocks;  v7x (64 MiB/TC) -> 8 MiB.
    vmem_cap = _vmem_capacity_bytes()
    target_block_bytes = max(1 << 20, min(16 * 1024 * 1024, vmem_cap // 8))

    # Sublane-aligned tile rows at ~target size; clamp to the largest sublane
    # multiple that fits in `rows` (callers guarantee rows >= sub).  No exact-
    # divisor shrink loop: a ragged last tile is handled by ceil-div + masking.
    tile_rows = max(sub, (target_block_bytes // row_bytes) // sub * sub)
    tile_rows = min(tile_rows, max(sub, (rows // sub) * sub))

    grid_n = _cdiv(rows, tile_rows)
    if grid_n > 1 and grid_n % 2:
        # Prefer an even count of (near-)equal tiles: the "parallel" grid axis
        # is sharded across v7x's two TensorCores and an odd count leaves one
        # TC idle on the tail tile.  On 1-TC chips this only trims the tile a
        # little.  Single-tile inputs are left alone (no forced split).
        tile_rows = max(sub, _round_up(_cdiv(rows, grid_n + 1), sub))
        tile_rows = min(tile_rows, max(sub, (rows // sub) * sub))
        grid_n = _cdiv(rows, tile_rows)

    block_bytes = tile_rows * row_bytes
    vmem_limit = int(min(vmem_cap, max(32 * 1024 * 1024, 4 * block_bytes + (4 << 20))))
    total_bytes = rows * cols * itemsize

    return pl.pallas_call(
        _identity_copy_kernel,
        out_shape=jax.ShapeDtypeStruct((rows, cols), x2d.dtype),
        grid_spec=pltpu.PrefetchScalarGridSpec(
            num_scalar_prefetch=0,
            grid=(grid_n,),
            in_specs=[pl.BlockSpec((tile_rows, cols), lambda i: (i, 0))],
            out_specs=pl.BlockSpec((tile_rows, cols), lambda i: (i, 0)),
        ),
        cost_estimate=pl.CostEstimate(
            flops=0, transcendentals=0, bytes_accessed=2 * total_bytes),
        compiler_params=pltpu.CompilerParams(
            dimension_semantics=("parallel",),
            vmem_limit_bytes=vmem_limit,
        ),
    )(x2d)


def _pallas_identity_whole_block(x2d):
    """Single whole-array block (exempt from the (8,128) rule) for residual shapes."""
    rows, cols = x2d.shape
    nbytes = rows * cols * jnp.dtype(x2d.dtype).itemsize
    vmem_cap = _vmem_capacity_bytes()
    vmem_limit = int(min(vmem_cap, max(32 * 1024 * 1024, 4 * nbytes + (4 << 20))))
    return pl.pallas_call(
        _identity_copy_kernel,
        out_shape=jax.ShapeDtypeStruct((rows, cols), x2d.dtype),
        cost_estimate=pl.CostEstimate(
            flops=0, transcendentals=0, bytes_accessed=2 * nbytes),
        compiler_params=pltpu.CompilerParams(vmem_limit_bytes=vmem_limit),
    )(x2d)


@jax.jit
def _pallas_identity_kernel_path(x):
    """Route an arbitrary tensor through the Pallas copy kernel (smoke-test path)."""
    orig_shape = x.shape
    n = x.size
    sub = _sublane_min(x.dtype)
    flat = x.reshape(-1)

    # Lane-dense slab: cols a large multiple of 128 for unmasked vst; rows only
    # need to be >= one sublane tile (ragged tiling handles the rest).
    cols = None
    for cand in (8192, 4096, 2048, 1024, 512, 256, 128):
        if n % cand == 0 and n // cand >= sub:
            cols = cand
            break

    if cols is not None:
        out2d = _pallas_identity_2d(flat.reshape(n // cols, cols))
        return out2d.reshape(orig_shape)

    # Residual path (n not a suitable multiple of 128): run the whole array as
    # one block instead of the old pad + slice fallback (which tripled HBM
    # traffic).  TODO(synk): for huge non-128-divisible tensors, split into an
    # aligned prefix + masked tail; irrelevant for BaseTask's demo shapes.
    out2d = _pallas_identity_whole_block(flat.reshape(1, n))
    return out2d.reshape(orig_shape)


def pallas_identity(x, *, force_kernel=False):
    """Identity over an arbitrary tensor.

    By default this is a true no-op (returns x) -- the aliased identity the
    container promises costs zero HBM traffic, so the kernel is skipped
    entirely.  With force_kernel=True the tensor is routed through the Pallas
    tiled copy kernel (used by the smoke test to exercise pallas_call on TPU).
    """
    if not force_kernel:
        return x
    return _pallas_identity_kernel_path(x)


# ----------------------------------------------------------------------------
# BaseTask container, mirroring the PyTorch class.
# ----------------------------------------------------------------------------
def build_network(modules):
    # TODO(synk): the real build_network factory lives elsewhere in socodec;
    # here it yields nothing (no sub-networks), matching an empty config.
    if not modules:
        return
    for name, network in modules.items():
        yield name, network


class BaseTask:
    def __init__(self, modules=None, mode: str = "train", **kwargs):
        self._modules = {}
        self.add_network(modules)
        self.mode = mode

    def add_network(self, modules):
        for name, network in build_network(modules):
            self._modules[name] = network

    def forward(self, *args, **kwargs):
        # Reference forward is `pass` -> returns None.  Semantics preserved.
        return None

    __call__ = forward


# ----------------------------------------------------------------------------
# Demo / smoke test
# ----------------------------------------------------------------------------
if __name__ == "__main__":
    key = jax.random.PRNGKey(0)
    # Small NCHW example consistent with a typical codec feature map.
    x = jax.random.normal(key, (2, 4, 16, 16), dtype=jnp.float32)

    # Container semantics: forward returns None, exactly like the PyTorch class.
    task = BaseTask(modules=None, mode="train")
    assert task.forward(x) is None
    assert task(x) is None

    # Production path: aliased identity short-circuits -- no kernel launch.
    y_fast = pallas_identity(x)
    assert y_fast is x

    # Smoke-test path: run the Pallas tiled-copy kernel once on TPU.
    y = pallas_identity(x, force_kernel=True)
    y = jax.block_until_ready(y)

    assert y.shape == x.shape and y.dtype == x.dtype
    assert bool(jnp.allclose(y, x))

    print("KERNEL_OK")
</pallas_src>

<mosaic_0001>
module attributes {stable_mosaic.version = 11 : i64} {
  func.func @_identity_copy_kernel(%arg0: i32, %arg1: memref<8x256xf32, #tpu.memory_space<vmem>>, %arg2: memref<8x256xf32, #tpu.memory_space<vmem>>) attributes {dimension_semantics = [#tpu.dimension_semantics<parallel>], iteration_bounds = array<i64: 1>, scalar_prefetch = 0 : i64, scratch_operands = 0 : i64, tpu.core_type = #tpu.core_type<tc>, window_params = [{transform_indices = @transform_0, window_bounds = array<i64: 8, 256>}, {transform_indices = @transform_1, window_bounds = array<i64: 8, 256>}]} {
    %c0 = arith.constant 0 : index
    %c0_0 = arith.constant 0 : index
    %0 = vector.load %arg1[%c0, %c0_0] : memref<8x256xf32, #tpu.memory_space<vmem>>, vector<8x256xf32>
    %c0_1 = arith.constant 0 : index
    %c0_2 = arith.constant 0 : index
    %1 = vector.load %arg2[%c0_1, %c0_2] : memref<8x256xf32, #tpu.memory_space<vmem>>, vector<8x256xf32>
    tpu.vector_store %arg2[%c0_1, %c0_2], %0 {strides = array<i32>} : memref<8x256xf32, #tpu.memory_space<vmem>>, vector<8x256xf32>,
    return
  }
  func.func @transform_0(%arg0: i32) -> (i32, i32) {
    %c0_i32 = arith.constant 0 : i32
    %c0_i32_0 = arith.constant 0 : i32
    return %arg0, %c0_i32 : i32, i32
  }
  func.func @transform_1(%arg0: i32) -> (i32, i32) {
    %c0_i32 = arith.constant 0 : i32
    %c0_i32_0 = arith.constant 0 : i32
    return %arg0, %c0_i32 : i32, i32
  }
}

</mosaic_0001>

<llo_original>
// kernel: _pallas_identity_kernel_path.1
$region0: #{_pallas_identity_kernel_path.1}
  #allocation0 [shape = 'u32[]', space=smem, size = 0x4, offset = 0x4, fixed_abs, tag = 'smem constant byte address 0x4 - core index']
  #allocation1 [shape = 'u32[72,128]{1,0:T(1,128)}', space=vmem, size = 0x9000, scoped, tag = 'internal scratch']
  %s0 = inlined_call_operand.vmem [shape: f32[8,256], index: 0, kind: input, shape index: {}]
  %s1 = inlined_call_operand.vmem [shape: f32[8,256], index: 1, kind: output, shape index: {}]
  %s2 = sld [smem:[#allocation0]]
  $region14: #{_pallas_identity_kernel_path.1} parent=0
    _
  %s4 = ssub.s32 1, %s2
  %s5 = scalar_select 0, %s4, %s2
  // Predicated region
  $region2: #{_pallas_identity_kernel_path.1} parent=0 // pred_check
    _
  $region3: #{_pallas_identity_kernel_path.1} parent=0 // pred_check_branch
    %7 = sbr.rel (0) target = $region5
  $region4: #{_pallas_identity_kernel_path.1} parent=0 // pred_region
    _
  $region5: #{_pallas_identity_kernel_path.1} parent=0 // pred_fallthru
    _
  %v8 = vld [vmem:[%s0] sm:$0xff]
  %v9 = vld [vmem:[%s0 + $0x8] sm:$0xff]
  %10 = vst [vmem:[%s1] sm:$0xff] %v8
  %11 = vst [vmem:[%s1 + $0x8] sm:$0xff] %v9
  // Predicated region
  $region6: #{_pallas_identity_kernel_path.1} parent=0 // pred_check
    _
  $region7: #{_pallas_identity_kernel_path.1} parent=0 // pred_check_branch
    %13 = sbr.rel (0) target = $region9
  $region8: #{_pallas_identity_kernel_path.1} parent=0 // pred_region
    _
  $region9: #{_pallas_identity_kernel_path.1} parent=0 // pred_fallthru
    _
  // Predicated region
  $region10: #{_pallas_identity_kernel_path.1} parent=0 // pred_check
    _
  $region11: #{_pallas_identity_kernel_path.1} parent=0 // pred_check_branch
    %15 = sbr.rel (0) target = $region13
  $region12: #{_pallas_identity_kernel_path.1} parent=0 // pred_region
    _
  $region13: #{_pallas_identity_kernel_path.1} parent=0 // pred_fallthru
    _

</llo_original>
